<compile_context>
chip_gen: v7x
topology: tpu7x:2x2x1
jax: 0.10.0
libtpu: 0.0.40
codegen_flags: <defaults>
</compile_context>

<pallas_src>
import jax
import jax.numpy as jnp
from jax.experimental import pallas as pl
from jax.experimental.pallas import tpu as pltpu

BN_EPS = 1e-5
LRELU_SLOPE = 0.1
HIDDEN = 128
LANE = 128
SUB = 16                     # sublane granule (covers bf16 packing)
TILE_B_MAX = 4096            # upper bound on the batch tile
VMEM_BUDGET = 32 * 1024 * 1024   # target footprint for tile sizing (safe on all gens)
VMEM_LIMIT_CAP = 48 * 1024 * 1024  # <= ~48 MiB leaves headroom under v7x 64 MiB


def _round_up(x, m):
    return ((x + m - 1) // m) * m


# ----------------------------- kernel ---------------------------------------
def attribute_net_kernel(x_ref, w1_ref, w2_ref, w3_ref, b12_ref, b3_ref, out_ref):
    """One batch tile: 3 matmuls (BN folded into weights) + bias + LeakyReLU."""
    cd = w1_ref.dtype
    # Cast x to the compute dtype in-kernel (VPU, free: kernel is mem-bound);
    # avoids a wrapper-side pad/cast pass and halves x HBM traffic.
    x = x_ref[...].astype(cd)
    b12 = b12_ref[...]          # (2, H) f32: row 0 = fused bias1, row 1 = fused bias2

    # --- layer 1: folded (Linear + BN) -> LeakyReLU(0.1) ---
    h = jnp.dot(x, w1_ref[...], preferred_element_type=jnp.float32) + b12[0:1, :]
    h = jnp.where(h > 0, h, LRELU_SLOPE * h)
    # Dropout(p=0.5): identity in eval mode.

    # --- layer 2: folded (Linear + BN) -> LeakyReLU(0.1) ---
    h = jnp.dot(h.astype(cd), w2_ref[...], preferred_element_type=jnp.float32) + b12[1:2, :]
    h = jnp.where(h > 0, h, LRELU_SLOPE * h)
    # Dropout(p=0.5): identity in eval mode.

    # --- layer 3: Linear (logits, lane-dense padded output) ---
    out = jnp.dot(h.astype(cd), w3_ref[...], preferred_element_type=jnp.float32) + b3_ref[...]
    out_ref[...] = out.astype(out_ref.dtype)


# ------------------------- one-time parameter prep --------------------------
def prepare_params(params, compute_dtype=jnp.bfloat16):
    """Fold BN running stats + Linear bias into the weights (eval mode only),
    pad n_att to a lane-dense width and cast matmul operands to compute_dtype.
    Call once; reuse the result across forwards."""
    D, H = params["w1"].shape
    n_att = params["w3"].shape[1]
    n_pad = _round_up(n_att, LANE)

    s1 = params["g1"] * jax.lax.rsqrt(params["v1"] + BN_EPS)          # (1, H)
    w1f = (params["w1"] * s1).astype(compute_dtype)                   # (D, H)
    b1f = (params["b1"] - params["m1"]) * s1 + params["be1"]          # (1, H) f32
    s2 = params["g2"] * jax.lax.rsqrt(params["v2"] + BN_EPS)
    w2f = (params["w2"] * s2).astype(compute_dtype)                   # (H, H)
    b2f = (params["b2"] - params["m2"]) * s2 + params["be2"]          # (1, H) f32
    # NOTE: if running_var is very small, s amplifies the folded weights and the
    # bf16 cast loses more precision; use compute_dtype=jnp.float32 in that case.

    w3p = jnp.zeros((H, n_pad), jnp.float32).at[:, :n_att].set(
        params["w3"]).astype(compute_dtype)                           # (H, n_pad)
    b3p = jnp.zeros((1, n_pad), jnp.float32).at[:, :n_att].set(params["b3"])
    b12 = jnp.concatenate([b1f, b2f], axis=0)                         # (2, H) f32

    return {"w1": w1f, "w2": w2f, "w3": w3p, "b12": b12, "b3": b3p,
            "n_att": n_att, "dim": D, "hidden": H}


# --------------------------- tile-size selection -----------------------------
def _vmem_tile_cap(D, H, n_pad, cd_bytes, out_bytes):
    """Largest batch tile whose double-buffered footprint fits VMEM_BUDGET."""
    weight_bytes = 2 * (D * H + H * H + H * n_pad) * cd_bytes + 2 * (2 * H + n_pad) * 4
    avail = max(VMEM_BUDGET - weight_bytes, 4 << 20)
    # x is read as f32 (4 B), output written in out dtype; plus f32 hidden temps.
    per_row = 2 * (D * 4 + n_pad * out_bytes) + 4 * H * 4
    cap = min(TILE_B_MAX, int(avail // per_row))
    return max(SUB, (cap // SUB) * SUB)


def _choose_tile_b(B, tile_cap):
    """Batch tile: large (amortize ~0.35us/step), >=2 even tiles when B allows
    (v7x 2 TCs), padding of the ragged last tile kept under one granule."""
    if B <= 2 * SUB:
        return B                                   # single full-extent tile
    n_tiles = max(2, -(-B // tile_cap))            # ceil-div, at least 2
    if n_tiles % 2:
        n_tiles += 1                               # even tile count
    tile_b = -(-B // n_tiles)
    return _round_up(tile_b, SUB)


# ------------------------------- forward ------------------------------------
def attribute_net_forward(x, prep):
    """x: [B, dim] float32; prep: output of prepare_params. Returns f32 [B, n_att]."""
    B, D = x.shape
    w1, w2, w3 = prep["w1"], prep["w2"], prep["w3"]
    b12, b3 = prep["b12"], prep["b3"]
    n_att, H = prep["n_att"], prep["hidden"]
    n_pad = w3.shape[1]
    cd = w1.dtype
    out_dtype = cd                                  # bf16 writeback on the fast path
    cd_bytes = jnp.dtype(cd).itemsize
    out_bytes = jnp.dtype(out_dtype).itemsize

    tile_cap = _vmem_tile_cap(D, H, n_pad, cd_bytes, out_bytes)
    tile_b = _choose_tile_b(B, tile_cap)
    grid = (pl.cdiv(B, tile_b),)
    n_rows = grid[0] * tile_b

    footprint = (
        2 * tile_b * D * 4                          # x (f32, double-buffered)
        + 2 * tile_b * n_pad * out_bytes            # out (double-buffered)
        + 2 * (D * H + H * H + H * n_pad) * cd_bytes  # resident weights
        + 2 * (2 * H + n_pad) * 4                   # biases
        + 4 * tile_b * H * 4                        # activation temps (generous)
    )
    vmem_limit = int(min(max(footprint * 2, 16 << 20), VMEM_LIMIT_CAP))

    flops = 2 * n_rows * (D * H + H * H + H * n_pad)
    bytes_accessed = (
        B * D * 4
        + (D * H + H * H + H * n_pad) * cd_bytes
        + (2 * H + n_pad) * 4
        + n_rows * n_pad * out_bytes
    )

    out_padded = pl.pallas_call(
        attribute_net_kernel,
        out_shape=jax.ShapeDtypeStruct((B, n_pad), out_dtype),
        grid=grid,
        in_specs=[
            pl.BlockSpec((tile_b, D), lambda i: (i, 0)),     # x: f32, tiled over batch
            pl.BlockSpec((D, H), lambda i: (0, 0)),          # w1 (folded), resident
            pl.BlockSpec((H, H), lambda i: (0, 0)),          # w2 (folded), resident
            pl.BlockSpec((H, n_pad), lambda i: (0, 0)),      # w3 (padded), resident
            pl.BlockSpec((2, H), lambda i: (0, 0)),          # fused biases 1 & 2 (f32)
            pl.BlockSpec((1, n_pad), lambda i: (0, 0)),      # bias 3 (padded, f32)
        ],
        out_specs=pl.BlockSpec((tile_b, n_pad), lambda i: (i, 0)),
        compiler_params=pltpu.CompilerParams(
            dimension_semantics=("parallel",),
            vmem_limit_bytes=vmem_limit,
        ),
        cost_estimate=pl.CostEstimate(
            flops=flops, transcendentals=0, bytes_accessed=bytes_accessed),
    )(x, w1, w2, w3, b12, b3)

    # Slice the valid attributes and upcast the tiny result in the wrapper.
    return out_padded[:B, :n_att].astype(jnp.float32)


# ------------------------------ init / reference ----------------------------
def init_params(key, dim, n_att, hidden=HIDDEN):
    """Deterministic init matching weights_init_kaiming:
       Linear: kaiming_normal_(a=0, mode='fan_out') => std = sqrt(2/fan_out),
               bias = 0.  BatchNorm: gamma = 1, beta = 0 (running mean=0, var=1).
    """
    k1, k2, k3 = jax.random.split(key, 3)

    def kaiming_linear(k, fan_in, fan_out):
        std = (2.0 / fan_out) ** 0.5
        # PyTorch weight shape is [out, in]; store transposed [in, out].
        w = jax.random.normal(k, (fan_out, fan_in), jnp.float32) * std
        return jnp.asarray(w.T)

    def bn(h):
        return (jnp.ones((1, h), jnp.float32),   # gamma
                jnp.zeros((1, h), jnp.float32),  # beta
                jnp.zeros((1, h), jnp.float32),  # running mean
                jnp.ones((1, h), jnp.float32))   # running var

    g1, be1, m1, v1 = bn(hidden)
    g2, be2, m2, v2 = bn(hidden)
    return {
        "w1": kaiming_linear(k1, dim, hidden),
        "b1": jnp.zeros((1, hidden), jnp.float32),
        "g1": g1, "be1": be1, "m1": m1, "v1": v1,
        "w2": kaiming_linear(k2, hidden, hidden),
        "b2": jnp.zeros((1, hidden), jnp.float32),
        "g2": g2, "be2": be2, "m2": m2, "v2": v2,
        "w3": kaiming_linear(k3, hidden, n_att),
        "b3": jnp.zeros((1, n_att), jnp.float32),
    }


def _reference_forward(x, p):
    """Pure-JAX eval-mode reference (unfolded BN, f32)."""
    def bn(h, g, be, m, v):
        return (h - m) / jnp.sqrt(v + BN_EPS) * g + be

    def lrelu(h):
        return jnp.where(h > 0, h, LRELU_SLOPE * h)

    h = x @ p["w1"] + p["b1"]
    h = lrelu(bn(h, p["g1"], p["be1"], p["m1"], p["v1"]))
    h = h @ p["w2"] + p["b2"]
    h = lrelu(bn(h, p["g2"], p["be2"], p["m2"], p["v2"]))
    return h @ p["w3"] + p["b3"]


if __name__ == "__main__":
    B, DIM, N_ATT = 8, 32, 8   # small shapes: batch=8, input dim=32, n_att=8

    key = jax.random.PRNGKey(0)
    kx, kp = jax.random.split(key)
    x = jax.random.normal(kx, (B, DIM), jnp.float32)
    params = init_params(kp, DIM, N_ATT)

    ref = _reference_forward(x, params)

    # f32 compute path: bit-close to the eval-mode reference.
    prep_f32 = prepare_params(params, compute_dtype=jnp.float32)
    out_f32 = jax.block_until_ready(attribute_net_forward(x, prep_f32))
    assert out_f32.shape == (B, N_ATT)
    assert jnp.allclose(out_f32, ref, atol=1e-4, rtol=1e-4)

    # bf16 compute path (v6e/v7x MXU fast path): looser tolerance.
    prep_bf16 = prepare_params(params, compute_dtype=jnp.bfloat16)
    out_bf16 = jax.block_until_ready(attribute_net_forward(x, prep_bf16))
    assert out_bf16.shape == (B, N_ATT)
    assert jnp.allclose(out_bf16, ref, atol=5e-2, rtol=5e-2)

    print("KERNEL_OK")
</pallas_src>

<mosaic_0001>
module attributes {stable_mosaic.version = 11 : i64} {
  func.func @attribute_net_kernel(%arg0: i32, %arg1: memref<8x32xf32, #tpu.memory_space<vmem>>, %arg2: memref<32x128xf32, #tpu.memory_space<vmem>>, %arg3: memref<128x128xf32, #tpu.memory_space<vmem>>, %arg4: memref<128x128xf32, #tpu.memory_space<vmem>>, %arg5: memref<2x128xf32, #tpu.memory_space<vmem>>, %arg6: memref<1x128xf32, #tpu.memory_space<vmem>>, %arg7: memref<8x128xf32, #tpu.memory_space<vmem>>) attributes {dimension_semantics = [#tpu.dimension_semantics<parallel>], iteration_bounds = array<i64: 1>, scalar_prefetch = 0 : i64, scratch_operands = 0 : i64, tpu.core_type = #tpu.core_type<tc>, window_params = [{transform_indices = @transform_0, window_bounds = array<i64: 8, 32>}, {pipeline_mode = #tpu.pipeline_mode<synchronous>, transform_indices = @transform_1, window_bounds = array<i64: 32, 128>}, {pipeline_mode = #tpu.pipeline_mode<synchronous>, transform_indices = @transform_2, window_bounds = array<i64: 128, 128>}, {pipeline_mode = #tpu.pipeline_mode<synchronous>, transform_indices = @transform_3, window_bounds = array<i64: 128, 128>}, {pipeline_mode = #tpu.pipeline_mode<synchronous>, transform_indices = @transform_4, window_bounds = array<i64: 2, 128>}, {pipeline_mode = #tpu.pipeline_mode<synchronous>, transform_indices = @transform_5, window_bounds = array<i64: 1, 128>}, {transform_indices = @transform_6, window_bounds = array<i64: 8, 128>}]} {
    %c0 = arith.constant 0 : index
    %c0_0 = arith.constant 0 : index
    %0 = vector.load %arg1[%c0, %c0_0] : memref<8x32xf32, #tpu.memory_space<vmem>>, vector<8x32xf32>
    %c0_1 = arith.constant 0 : index
    %c0_2 = arith.constant 0 : index
    %1 = vector.load %arg5[%c0_1, %c0_2] : memref<2x128xf32, #tpu.memory_space<vmem>>, vector<2x128xf32>
    %c0_3 = arith.constant 0 : index
    %c0_4 = arith.constant 0 : index
    %2 = vector.load %arg2[%c0_3, %c0_4] : memref<32x128xf32, #tpu.memory_space<vmem>>, vector<32x128xf32>
    %cst = arith.constant dense<0.000000e+00> : vector<8x128xf32>
    %3 = tpu.matmul %0, %2, %cst {dimension_numbers = #tpu.dot_dimension_numbers<[1], [0], [0], [1], [0, 0, 1, 1], [], []>} : vector<8x32xf32>, vector<32x128xf32>, vector<8x128xf32> -> vector<8x128xf32>
    %4 = vector.extract_strided_slice %1 {offsets = [0, 0], sizes = [1, 128], strides = [1, 1]} : vector<2x128xf32> to vector<1x128xf32>
    %5 = vector.broadcast %4 : vector<1x128xf32> to vector<8x128xf32>
    %6 = arith.addf %3, %5 : vector<8x128xf32>
    %cst_5 = arith.constant 0.000000e+00 : f32
    %7 = vector.broadcast %cst_5 : f32 to vector<8x128xf32>
    %8 = arith.cmpf ogt, %6, %7 : vector<8x128xf32>
    %cst_6 = arith.constant 1.000000e-01 : f32
    %9 = vector.broadcast %cst_6 : f32 to vector<8x128xf32>
    %10 = arith.mulf %9, %6 : vector<8x128xf32>
    %11 = arith.select %8, %6, %10 : vector<8x128xi1>, vector<8x128xf32>
    %c0_7 = arith.constant 0 : index
    %c0_8 = arith.constant 0 : index
    %12 = vector.load %arg3[%c0_7, %c0_8] : memref<128x128xf32, #tpu.memory_space<vmem>>, vector<128x128xf32>
    %cst_9 = arith.constant dense<0.000000e+00> : vector<8x128xf32>
    %13 = tpu.matmul %11, %12, %cst_9 {dimension_numbers = #tpu.dot_dimension_numbers<[1], [0], [0], [1], [0, 0, 1, 1], [], []>} : vector<8x128xf32>, vector<128x128xf32>, vector<8x128xf32> -> vector<8x128xf32>
    %14 = vector.extract_strided_slice %1 {offsets = [1, 0], sizes = [1, 128], strides = [1, 1]} : vector<2x128xf32> to vector<1x128xf32>
    %15 = vector.broadcast %14 : vector<1x128xf32> to vector<8x128xf32>
    %16 = arith.addf %13, %15 : vector<8x128xf32>
    %cst_10 = arith.constant 0.000000e+00 : f32
    %17 = vector.broadcast %cst_10 : f32 to vector<8x128xf32>
    %18 = arith.cmpf ogt, %16, %17 : vector<8x128xf32>
    %cst_11 = arith.constant 1.000000e-01 : f32
    %19 = vector.broadcast %cst_11 : f32 to vector<8x128xf32>
    %20 = arith.mulf %19, %16 : vector<8x128xf32>
    %21 = arith.select %18, %16, %20 : vector<8x128xi1>, vector<8x128xf32>
    %c0_12 = arith.constant 0 : index
    %c0_13 = arith.constant 0 : index
    %22 = vector.load %arg4[%c0_12, %c0_13] : memref<128x128xf32, #tpu.memory_space<vmem>>, vector<128x128xf32>
    %cst_14 = arith.constant dense<0.000000e+00> : vector<8x128xf32>
    %23 = tpu.matmul %21, %22, %cst_14 {dimension_numbers = #tpu.dot_dimension_numbers<[1], [0], [0], [1], [0, 0, 1, 1], [], []>} : vector<8x128xf32>, vector<128x128xf32>, vector<8x128xf32> -> vector<8x128xf32>
    %c0_15 = arith.constant 0 : index
    %c0_16 = arith.constant 0 : index
    %24 = vector.load %arg6[%c0_15, %c0_16] : memref<1x128xf32, #tpu.memory_space<vmem>>, vector<1x128xf32>
    %25 = vector.broadcast %24 : vector<1x128xf32> to vector<8x128xf32>
    %26 = arith.addf %23, %25 : vector<8x128xf32>
    %c0_17 = arith.constant 0 : index
    %c0_18 = arith.constant 0 : index
    %27 = vector.load %arg7[%c0_17, %c0_18] : memref<8x128xf32, #tpu.memory_space<vmem>>, vector<8x128xf32>
    tpu.vector_store %arg7[%c0_17, %c0_18], %26 {strides = array<i32>} : memref<8x128xf32, #tpu.memory_space<vmem>>, vector<8x128xf32>,
    return
  }
  func.func @transform_0(%arg0: i32) -> (i32, i32) {
    %c0_i32 = arith.constant 0 : i32
    %c0_i32_0 = arith.constant 0 : i32
    return %arg0, %c0_i32 : i32, i32
  }
  func.func @transform_1(%arg0: i32) -> (i32, i32) {
    %c0_i32 = arith.constant 0 : i32
    %c0_i32_0 = arith.constant 0 : i32
    %c0_i32_1 = arith.constant 0 : i32
    return %c0_i32, %c0_i32_0 : i32, i32
  }
  func.func @transform_2(%arg0: i32) -> (i32, i32) {
    %c0_i32 = arith.constant 0 : i32
    %c0_i32_0 = arith.constant 0 : i32
    %c0_i32_1 = arith.constant 0 : i32
    return %c0_i32, %c0_i32_0 : i32, i32
  }
  func.func @transform_3(%arg0: i32) -> (i32, i32) {
    %c0_i32 = arith.constant 0 : i32
    %c0_i32_0 = arith.constant 0 : i32
    %c0_i32_1 = arith.constant 0 : i32
    return %c0_i32, %c0_i32_0 : i32, i32
  }
  func.func @transform_4(%arg0: i32) -> (i32, i32) {
    %c0_i32 = arith.constant 0 : i32
    %c0_i32_0 = arith.constant 0 : i32
    %c0_i32_1 = arith.constant 0 : i32
    return %c0_i32, %c0_i32_0 : i32, i32
  }
  func.func @transform_5(%arg0: i32) -> (i32, i32) {
    %c0_i32 = arith.constant 0 : i32
    %c0_i32_0 = arith.constant 0 : i32
    %c0_i32_1 = arith.constant 0 : i32
    return %c0_i32, %c0_i32_0 : i32, i32
  }
  func.func @transform_6(%arg0: i32) -> (i32, i32) {
    %c0_i32 = arith.constant 0 : i32
    %c0_i32_0 = arith.constant 0 : i32
    return %arg0, %c0_i32 : i32, i32
  }
}

</mosaic_0001>

<llo_original>
// kernel: tpu_custom_call.1
$region0: #{tpu_custom_call.1}
  #allocation0 [shape = 'u32[]', space=smem, size = 0x4, offset = 0x4, fixed_abs, tag = 'smem constant byte address 0x4 - core index']
  #allocation1 [shape = 'u32[144,128]{1,0:T(1,128)}', space=vmem, size = 0x12000, scoped, tag = 'internal scratch']
  %s0 = inlined_call_operand.hbm [shape: f32[8,32], index: 0, kind: input, shape index: {}]
  %s1 = inlined_call_operand.hbm [shape: f32[32,128], index: 1, kind: input, shape index: {}]
  %s2 = inlined_call_operand.hbm [shape: f32[128,128], index: 2, kind: input, shape index: {}]
  %s3 = inlined_call_operand.hbm [shape: f32[128,128], index: 3, kind: input, shape index: {}]
  %s4 = inlined_call_operand.vmem [shape: f32[2,128], index: 4, kind: input, shape index: {}]
  %s5 = inlined_call_operand.vmem [shape: f32[1,128], index: 5, kind: input, shape index: {}]
  %s6 = inlined_call_operand.hbm [shape: f32[8,128], index: 6, kind: output, shape index: {}]
  %s7 = sld [smem:[#allocation0]]
  $region50: #{tpu_custom_call.1} parent=0
    _
  %s9 = ssub.s32 1, %s7
  %s10 = scalar_select 0, %s9, %s7
  $region1: #{tpu_custom_call.1} parent=0
    #allocation2 [shape = 'u8[4096]{0}', space=vmem, size = 0x1000, scoped, tag = 'input window, operand 0, single buffered']
    #allocation3 [shape = 's32[1]{0}', space=sflag, size = 0x4, scoped, tag = 'scoped memory for tpu_custom_call.1']
    #allocation4 [shape = 's32[1]{0}', space=sflag, size = 0x4, scoped, tag = 'scoped memory for tpu_custom_call.1']
    #allocation5 [shape = 'u8[16384]{0}', space=vmem, size = 0x4000, scoped, tag = 'input window, operand 1, single buffered']
    #allocation6 [shape = 's32[1]{0}', space=sflag, size = 0x4, scoped, tag = 'scoped memory for tpu_custom_call.1']
    #allocation7 [shape = 'u8[65536]{0}', space=vmem, size = 0x10000, scoped, tag = 'input window, operand 2, single buffered']
    #allocation8 [shape = 'u8[65536]{0}', space=vmem, size = 0x10000, scoped, tag = 'input window, operand 3, single buffered']
    #allocation9 [shape = 's32[1]{0}', space=sflag, size = 0x4, scoped, tag = 'scoped memory for tpu_custom_call.1']
    #allocation10 [shape = 'u8[4096]{0}', space=vmem, size = 0x1000, scoped, tag = 'output window, operand 0, single buffered']
    %11 = vsyncpa [#allocation3], 0
    %12 = vsyncpa [#allocation6], 0
    %13 = vsyncpa [#allocation9], 0
    %14 = vsyncpa [#allocation4], 0
    // Predicated region
    $region2: #{tpu_custom_call.1} parent=1 // pred_check
      _
    $region3: #{tpu_custom_call.1} parent=1 // pred_check_branch
      %16 = sbr.rel (0) target = $region5
    $region4: #{tpu_custom_call.1} parent=1 // pred_region
      %s18 = ssub.s32 128, 128
      %19 = vsyncadd [#allocation3], %s18
      %s21 = sshll.u32 [#allocation2], 4
      %s22 = int_to_ptr.vmem [resolvable:$true] %s21
      %24 = dma.hbm_to_vmem [thread:$0]  %s0, 128, %s22, [#allocation3]
    $region5: #{tpu_custom_call.1} parent=1 // pred_fallthru
      _
    // Predicated region
    $region6: #{tpu_custom_call.1} parent=1 // pred_check
      _
    $region7: #{tpu_custom_call.1} parent=1 // pred_check_branch
      %26 = sbr.rel (0) target = $region9
    $region8: #{tpu_custom_call.1} parent=1 // pred_region
      %s28 = ssub.s32 512, 512
      %29 = vsyncadd [#allocation6], %s28
      %s30 = sshll.u32 [#allocation5], 4
      %s31 = int_to_ptr.vmem [resolvable:$true] %s30
      %36 = dma.hbm_to_vmem [thread:$0]  %s1, 512, %s31, [#allocation6], 128, 128, 8
    $region9: #{tpu_custom_call.1} parent=1 // pred_fallthru
      _
    // Predicated region
    $region10: #{tpu_custom_call.1} parent=1 // pred_check
      _
    $region11: #{tpu_custom_call.1} parent=1 // pred_check_branch
      %38 = sbr.rel (0) target = $region13
    $region12: #{tpu_custom_call.1} parent=1 // pred_region
      %s40 = ssub.s32 2048, 2048
      %41 = vsyncadd [#allocation6], %s40
      %s42 = sshll.u32 [#allocation7], 4
      %s43 = int_to_ptr.vmem [resolvable:$true] %s42
      %48 = dma.hbm_to_vmem [thread:$0]  %s2, 2048, %s43, [#allocation6], 128, 128, 8
    $region13: #{tpu_custom_call.1} parent=1 // pred_fallthru
      _
    // Predicated region
    $region14: #{tpu_custom_call.1} parent=1 // pred_check
      _
    $region15: #{tpu_custom_call.1} parent=1 // pred_check_branch
      %50 = sbr.rel (0) target = $region17
    $region16: #{tpu_custom_call.1} parent=1 // pred_region
      %s52 = ssub.s32 2048, 2048
      %53 = vsyncadd [#allocation9], %s52
      %s54 = sshll.u32 [#allocation8], 4
      %s55 = int_to_ptr.vmem [resolvable:$true] %s54
      %60 = dma.hbm_to_vmem [thread:$0]  %s3, 2048, %s55, [#allocation9], 128, 128, 8
    $region17: #{tpu_custom_call.1} parent=1 // pred_fallthru
      _
    // Predicated region
    $region18: #{tpu_custom_call.1} parent=1 // pred_check
      _
    $region19: #{tpu_custom_call.1} parent=1 // pred_check_branch
      %62 = sbr.rel (0) target = $region21
    $region20: #{tpu_custom_call.1} parent=1 // pred_region
      _
    $region21: #{tpu_custom_call.1} parent=1 // pred_fallthru
      _
    // Predicated region
    $region22: #{tpu_custom_call.1} parent=1 // pred_check
      _
    $region23: #{tpu_custom_call.1} parent=1 // pred_check_branch
      %64 = sbr.rel (0) target = $region25
    $region24: #{tpu_custom_call.1} parent=1 // pred_region
      _
    $region25: #{tpu_custom_call.1} parent=1 // pred_fallthru
      _
    // Predicated region
    $region26: #{tpu_custom_call.1} parent=1 // pred_check
      _
    $region27: #{tpu_custom_call.1} parent=1 // pred_check_branch
      %66 = sbr.rel (0) target = $region29
    $region28: #{tpu_custom_call.1} parent=1 // pred_region
      %67 = dma.done [#allocation3], 128
    $region29: #{tpu_custom_call.1} parent=1 // pred_fallthru
      _
    // Predicated region
    $region30: #{tpu_custom_call.1} parent=1 // pred_check
      _
    $region31: #{tpu_custom_call.1} parent=1 // pred_check_branch
      %69 = sbr.rel (0) target = $region33
    $region32: #{tpu_custom_call.1} parent=1 // pred_region
      %70 = dma.done [#allocation6], 512
    $region33: #{tpu_custom_call.1} parent=1 // pred_fallthru
      _
    // Predicated region
    $region34: #{tpu_custom_call.1} parent=1 // pred_check
      _
    $region35: #{tpu_custom_call.1} parent=1 // pred_check_branch
      %72 = sbr.rel (0) target = $region37
    $region36: #{tpu_custom_call.1} parent=1 // pred_region
      %73 = dma.done [#allocation6], 2048
    $region37: #{tpu_custom_call.1} parent=1 // pred_fallthru
      _
    // Predicated region
    $region38: #{tpu_custom_call.1} parent=1 // pred_check
      _
    $region39: #{tpu_custom_call.1} parent=1 // pred_check_branch
      %75 = sbr.rel (0) target = $region41
    $region40: #{tpu_custom_call.1} parent=1 // pred_region
      %76 = dma.done [#allocation9], 2048
    $region41: #{tpu_custom_call.1} parent=1 // pred_fallthru
      _
    %v77 = vld [vmem:[#allocation2] sm:$0xff]
    %v78 = vld [vmem:[%s4] sm:$0x3]
    %v79 = vld [vmem:[#allocation5] sm:$0xff]
    %v80 = vld [vmem:[#allocation5 + $0x8] sm:$0xff]
    %v81 = vld [vmem:[#allocation5 + $0x10] sm:$0xff]
    %v82 = vld [vmem:[#allocation5 + $0x18] sm:$0xff]
    %v83 = vlaneseq
    %v84 = vshrl.u32 %v83, 7
    %v85 = vsub.s32 0, %v84
    %v86 = vrot.slane %v78, %v85
    %vm87 = vcmask 261120
    %v89 = vsel %vm87, %v77, 0
    %91 = vmatprep.subr.mxu0 0.0
    %92 = vmatpush1.msra.mxu0 %v79
    %93 = vmatprep.subr.mxu0 0.0
    %94 = vmatpush1.msra.mxu0 %v80
    %95 = vmatprep.subr.mxu0 0.0
    %96 = vmatpush1.msra.mxu0 %v81
    %97 = vmatprep.subr.mxu0 0.0
    %98 = vmatpush1.msra.mxu0 %v82
    %99 = vmatprep.subr.mxu0 0.0
    %100 = vmatpush1.msra.mxu0 0.0
    %101 = vmatprep.subr.mxu0 0.0
    %102 = vmatpush1.msra.mxu0 0.0
    %103 = vmatprep.subr.mxu0 0.0
    %104 = vmatpush1.msra.mxu0 0.0
    %105 = vmatprep.subr.mxu0 0.0
    %106 = vmatpush1.msra.mxu0 0.0
    %107 = vmatprep.subr.mxu0 0.0
    %108 = vmatpush1.msra.mxu0 0.0
    %109 = vmatprep.subr.mxu0 0.0
    %110 = vmatpush1.msra.mxu0 0.0
    %111 = vmatprep.subr.mxu0 0.0
    %112 = vmatpush1.msra.mxu0 0.0
    %113 = vmatprep.subr.mxu0 0.0
    %114 = vmatpush1.msra.mxu0 0.0
    %115 = vmatprep.subr.mxu0 0.0
    %116 = vmatpush1.msra.mxu0 0.0
    %117 = vmatprep.subr.mxu0 0.0
    %118 = vmatpush1.msra.mxu0 0.0
    %119 = vmatprep.subr.mxu0 0.0
    %120 = vmatpush1.msra.mxu0 0.0
    %121 = vmatprep.subr.mxu0 0.0
    %122 = vmatpush1.msra.mxu0 0.0
    %123 = vmatprep.subr.mxu0 0.0
    %124 = vmatpush1.msra.mxu0 0.0
    %125 = vmatprep.subr.mxu0 0.0
    %126 = vmatpush1.msra.mxu0 0.0
    %127 = vmatprep.subr.mxu0 0.0
    %128 = vmatpush1.msra.mxu0 0.0
    %129 = vmatprep.subr.mxu0 0.0
    %130 = vmatpush1.msra.mxu0 0.0
    %131 = vmatprep.subr.mxu0 0.0
    %132 = vmatpush1.msra.mxu0 0.0
    %133 = vmatprep.subr.mxu0 0.0
    %134 = vmatpush1.msra.mxu0 0.0
    %135 = vmatprep.subr.mxu0 0.0
    %136 = vmatpush1.msra.mxu0 0.0
    %137 = vmatprep.subr.mxu0 0.0
    %138 = vmatpush1.msra.mxu0 0.0
    %139 = vmatprep.subr.mxu0 0.0
    %140 = vmatpush1.msra.mxu0 0.0
    %141 = vmatprep.subr.mxu0 0.0
    %142 = vmatpush1.msra.mxu0 0.0
    %143 = vmatprep.subr.mxu0 0.0
    %144 = vmatpush1.msra.mxu0 0.0
    %145 = vmatprep.subr.mxu0 0.0
    %146 = vmatpush1.msra.mxu0 0.0
    %147 = vmatprep.subr.mxu0 0.0
    %148 = vmatpush1.msra.mxu0 0.0
    %149 = vmatprep.subr.mxu0 0.0
    %150 = vmatpush1.msra.mxu0 0.0
    %151 = vmatprep.subr.mxu0 0.0
    %152 = vmatpush1.msra.mxu0 0.0
    %153 = vmatprep.subr.mxu0 0.0
    %154 = vmatpush1.msra.mxu0 0.0
    %155 = vmatprep.mubr.f32.mxu0 0.0
    %156 = vmatmul.mubr.f32.gmra.mrb[0].mxu0 %v89
    %v157 = vpop.f32.mrb[0].mxu0
    %v158 = vadd.f32 %v86, %v157
    %v159 = vpop.f32.mrb[0].mxu0
    %160 = vdwg.mxu0
    %vm161 = vcmp.gt.f32.partialorder %v158, 0.0
    %v162 = vmul.f32 %v158, 0.1
    %v163 = vsel %vm161, %v158, %v162
    %v164 = vld [vmem:[#allocation7] sm:$0xff]
    %v165 = vld [vmem:[#allocation7 + $0x8] sm:$0xff]
    %v166 = vld [vmem:[#allocation7 + $0x10] sm:$0xff]
    %v167 = vld [vmem:[#allocation7 + $0x18] sm:$0xff]
    %v168 = vld [vmem:[#allocation7 + $0x20] sm:$0xff]
    %v169 = vld [vmem:[#allocation7 + $0x28] sm:$0xff]
    %v170 = vld [vmem:[#allocation7 + $0x30] sm:$0xff]
    %v171 = vld [vmem:[#allocation7 + $0x38] sm:$0xff]
    %v172 = vld [vmem:[#allocation7 + $0x40] sm:$0xff]
    %v173 = vld [vmem:[#allocation7 + $0x48] sm:$0xff]
    %v174 = vld [vmem:[#allocation7 + $0x50] sm:$0xff]
    %v175 = vld [vmem:[#allocation7 + $0x58] sm:$0xff]
    %v176 = vld [vmem:[#allocation7 + $0x60] sm:$0xff]
    %v177 = vld [vmem:[#allocation7 + $0x68] sm:$0xff]
    %v178 = vld [vmem:[#allocation7 + $0x70] sm:$0xff]
    %v179 = vld [vmem:[#allocation7 + $0x78] sm:$0xff]
    %v180 = vlaneseq
    %v181 = vshrl.u32 %v180, 7
    %v182 = vsub.s32 1, %v181
    %v183 = vrot.slane %v78, %v182
    %184 = vmatprep.subr.mxu0 0.0
    %185 = vmatpush1.msra.mxu0 %v164
    %186 = vmatprep.subr.mxu0 0.0
    %187 = vmatpush1.msra.mxu0 %v165
    %188 = vmatprep.subr.mxu0 0.0
    %189 = vmatpush1.msra.mxu0 %v166
    %190 = vmatprep.subr.mxu0 0.0
    %191 = vmatpush1.msra.mxu0 %v167
    %192 = vmatprep.subr.mxu0 0.0
    %193 = vmatpush1.msra.mxu0 %v168
    %194 = vmatprep.subr.mxu0 0.0
    %195 = vmatpush1.msra.mxu0 %v169
    %196 = vmatprep.subr.mxu0 0.0
    %197 = vmatpush1.msra.mxu0 %v170
    %198 = vmatprep.subr.mxu0 0.0
    %199 = vmatpush1.msra.mxu0 %v171
    %200 = vmatprep.subr.mxu0 0.0
    %201 = vmatpush1.msra.mxu0 %v172
    %202 = vmatprep.subr.mxu0 0.0
    %203 = vmatpush1.msra.mxu0 %v173
    %204 = vmatprep.subr.mxu0 0.0
    %205 = vmatpush1.msra.mxu0 %v174
    %206 = vmatprep.subr.mxu0 0.0
    %207 = vmatpush1.msra.mxu0 %v175
    %208 = vmatprep.subr.mxu0 0.0
    %209 = vmatpush1.msra.mxu0 %v176
    %210 = vmatprep.subr.mxu0 0.0
    %211 = vmatpush1.msra.mxu0 %v177
    %212 = vmatprep.subr.mxu0 0.0
    %213 = vmatpush1.msra.mxu0 %v178
    %214 = vmatprep.subr.mxu0 0.0
    %215 = vmatpush1.msra.mxu0 %v179
    %216 = vmatprep.subr.mxu0 0.0
    %217 = vmatpush1.msra.mxu0 0.0
    %218 = vmatprep.subr.mxu0 0.0
    %219 = vmatpush1.msra.mxu0 0.0
    %220 = vmatprep.subr.mxu0 0.0
    %221 = vmatpush1.msra.mxu0 0.0
    %222 = vmatprep.subr.mxu0 0.0
    %223 = vmatpush1.msra.mxu0 0.0
    %224 = vmatprep.subr.mxu0 0.0
    %225 = vmatpush1.msra.mxu0 0.0
    %226 = vmatprep.subr.mxu0 0.0
    %227 = vmatpush1.msra.mxu0 0.0
    %228 = vmatprep.subr.mxu0 0.0
    %229 = vmatpush1.msra.mxu0 0.0
    %230 = vmatprep.subr.mxu0 0.0
    %231 = vmatpush1.msra.mxu0 0.0
    %232 = vmatprep.subr.mxu0 0.0
    %233 = vmatpush1.msra.mxu0 0.0
    %234 = vmatprep.subr.mxu0 0.0
    %235 = vmatpush1.msra.mxu0 0.0
    %236 = vmatprep.subr.mxu0 0.0
    %237 = vmatpush1.msra.mxu0 0.0
    %238 = vmatprep.subr.mxu0 0.0
    %239 = vmatpush1.msra.mxu0 0.0
    %240 = vmatprep.subr.mxu0 0.0
    %241 = vmatpush1.msra.mxu0 0.0
    %242 = vmatprep.subr.mxu0 0.0
    %243 = vmatpush1.msra.mxu0 0.0
    %244 = vmatprep.subr.mxu0 0.0
    %245 = vmatpush1.msra.mxu0 0.0
    %246 = vmatprep.subr.mxu0 0.0
    %247 = vmatpush1.msra.mxu0 0.0
    %248 = vmatprep.mubr.f32.mxu0 0.0
    %249 = vmatmul.mubr.f32.gmra.mrb[0].mxu0 %v163
    %v250 = vpop.f32.mrb[0].mxu0
    %v251 = vadd.f32 %v183, %v250
    %v252 = vpop.f32.mrb[0].mxu0
    %253 = vdwg.mxu0
    %vm254 = vcmp.gt.f32.partialorder %v251, 0.0
    %v255 = vmul.f32 %v251, 0.1
    %v256 = vsel %vm254, %v251, %v255
    %v257 = vld [vmem:[#allocation8] sm:$0xff]
    %v258 = vld [vmem:[#allocation8 + $0x8] sm:$0xff]
    %v259 = vld [vmem:[#allocation8 + $0x10] sm:$0xff]
    %v260 = vld [vmem:[#allocation8 + $0x18] sm:$0xff]
    %v261 = vld [vmem:[#allocation8 + $0x20] sm:$0xff]
    %v262 = vld [vmem:[#allocation8 + $0x28] sm:$0xff]
    %v263 = vld [vmem:[#allocation8 + $0x30] sm:$0xff]
    %v264 = vld [vmem:[#allocation8 + $0x38] sm:$0xff]
    %v265 = vld [vmem:[#allocation8 + $0x40] sm:$0xff]
    %v266 = vld [vmem:[#allocation8 + $0x48] sm:$0xff]
    %v267 = vld [vmem:[#allocation8 + $0x50] sm:$0xff]
    %v268 = vld [vmem:[#allocation8 + $0x58] sm:$0xff]
    %v269 = vld [vmem:[#allocation8 + $0x60] sm:$0xff]
    %v270 = vld [vmem:[#allocation8 + $0x68] sm:$0xff]
    %v271 = vld [vmem:[#allocation8 + $0x70] sm:$0xff]
    %v272 = vld [vmem:[#allocation8 + $0x78] sm:$0xff]
    %v273 = vld [vmem:[%s5] sm:$0x1]
    %v275 = vlaneseq
    %v276 = vshrl.u32 %v275, 7
    %v277 = vsub.s32 0, %v276
    %v278 = vrot.slane %v273, %v277
    %280 = vmatprep.subr.mxu0 0.0
    %281 = vmatpush1.msra.mxu0 %v257
    %282 = vmatprep.subr.mxu0 0.0
    %283 = vmatpush1.msra.mxu0 %v258
    %284 = vmatprep.subr.mxu0 0.0
    %285 = vmatpush1.msra.mxu0 %v259
    %286 = vmatprep.subr.mxu0 0.0
    %287 = vmatpush1.msra.mxu0 %v260
    %288 = vmatprep.subr.mxu0 0.0
    %289 = vmatpush1.msra.mxu0 %v261
    %290 = vmatprep.subr.mxu0 0.0
    %291 = vmatpush1.msra.mxu0 %v262
    %292 = vmatprep.subr.mxu0 0.0
    %293 = vmatpush1.msra.mxu0 %v263
    %294 = vmatprep.subr.mxu0 0.0
    %295 = vmatpush1.msra.mxu0 %v264
    %296 = vmatprep.subr.mxu0 0.0
    %297 = vmatpush1.msra.mxu0 %v265
    %298 = vmatprep.subr.mxu0 0.0
    %299 = vmatpush1.msra.mxu0 %v266
    %300 = vmatprep.subr.mxu0 0.0
    %301 = vmatpush1.msra.mxu0 %v267
    %302 = vmatprep.subr.mxu0 0.0
    %303 = vmatpush1.msra.mxu0 %v268
    %304 = vmatprep.subr.mxu0 0.0
    %305 = vmatpush1.msra.mxu0 %v269
    %306 = vmatprep.subr.mxu0 0.0
    %307 = vmatpush1.msra.mxu0 %v270
    %308 = vmatprep.subr.mxu0 0.0
    %309 = vmatpush1.msra.mxu0 %v271
    %310 = vmatprep.subr.mxu0 0.0
    %311 = vmatpush1.msra.mxu0 %v272
    %312 = vmatprep.subr.mxu0 0.0
    %313 = vmatpush1.msra.mxu0 0.0
    %314 = vmatprep.subr.mxu0 0.0
    %315 = vmatpush1.msra.mxu0 0.0
    %316 = vmatprep.subr.mxu0 0.0
    %317 = vmatpush1.msra.mxu0 0.0
    %318 = vmatprep.subr.mxu0 0.0
    %319 = vmatpush1.msra.mxu0 0.0
    %320 = vmatprep.subr.mxu0 0.0
    %321 = vmatpush1.msra.mxu0 0.0
    %322 = vmatprep.subr.mxu0 0.0
    %323 = vmatpush1.msra.mxu0 0.0
    %324 = vmatprep.subr.mxu0 0.0
    %325 = vmatpush1.msra.mxu0 0.0
    %326 = vmatprep.subr.mxu0 0.0
    %327 = vmatpush1.msra.mxu0 0.0
    %328 = vmatprep.subr.mxu0 0.0
    %329 = vmatpush1.msra.mxu0 0.0
    %330 = vmatprep.subr.mxu0 0.0
    %331 = vmatpush1.msra.mxu0 0.0
    %332 = vmatprep.subr.mxu0 0.0
    %333 = vmatpush1.msra.mxu0 0.0
    %334 = vmatprep.subr.mxu0 0.0
    %335 = vmatpush1.msra.mxu0 0.0
    %336 = vmatprep.subr.mxu0 0.0
    %337 = vmatpush1.msra.mxu0 0.0
    %338 = vmatprep.subr.mxu0 0.0
    %339 = vmatpush1.msra.mxu0 0.0
    %340 = vmatprep.subr.mxu0 0.0
    %341 = vmatpush1.msra.mxu0 0.0
    %342 = vmatprep.subr.mxu0 0.0
    %343 = vmatpush1.msra.mxu0 0.0
    %344 = vmatprep.mubr.f32.mxu0 0.0
    %345 = vmatmul.mubr.f32.gmra.mrb[0].mxu0 %v256
    %v346 = vpop.f32.mrb[0].mxu0
    %v347 = vadd.f32 %v278, %v346
    %v348 = vpop.f32.mrb[0].mxu0
    %349 = vdwg.mxu0
    %350 = vst [vmem:[#allocation10] sm:$0xff] %v347
    // Predicated region
    $region42: #{tpu_custom_call.1} parent=1 // pred_check
      _
    $region43: #{tpu_custom_call.1} parent=1 // pred_check_branch
      %352 = sbr.rel (0) target = $region45
    $region44: #{tpu_custom_call.1} parent=1 // pred_region
      %s354 = ssub.s32 128, 128
      %355 = vsyncadd [#allocation4], %s354
      %s357 = sshll.u32 [#allocation10], 4
      %s358 = int_to_ptr.vmem [resolvable:$true] %s357
      %360 = dma.vmem_to_hbm [thread:$0]  %s358, 128, %s6, [#allocation4]
    $region45: #{tpu_custom_call.1} parent=1 // pred_fallthru
      _
    // Predicated region
    $region46: #{tpu_custom_call.1} parent=1 // pred_check
      _
    $region47: #{tpu_custom_call.1} parent=1 // pred_check_branch
      %362 = sbr.rel (0) target = $region49
    $region48: #{tpu_custom_call.1} parent=1 // pred_region
      %363 = dma.done [#allocation4], 128
    $region49: #{tpu_custom_call.1} parent=1 // pred_fallthru
      _
    %364 = vsyncpa [#allocation3], 1
    %365 = vsyncpa [#allocation6], 1
    %366 = vsyncpa [#allocation9], 1
    %367 = vsyncpa [#allocation4], 1

</llo_original>
